<compile_context>
chip_gen: v7x
topology: tpu7x:2x2x1
jax: 0.10.0
libtpu: 0.0.40
codegen_flags: <defaults>
</compile_context>

<pallas_src>
import jax
import jax.numpy as jnp
from jax.experimental import pallas as pl
from jax.experimental.pallas import tpu as pltpu


def _gelu(x):
    # tanh-approximate GELU: polynomial on the VPU + tanh on the EUP slot.
    # (Slight deviation from PyTorch's default exact-erf GELU.)
    return jax.nn.gelu(x, approximate=True)


# ---------------------------------------------------------------------------
# Kernel A: weights fully VMEM-resident (constant block index -> fetched once).
# ---------------------------------------------------------------------------
def _ffn_resident_kernel(x_ref, w1_ref, b1_ref, w2_ref, b2_ref, o_ref):
    x = x_ref[...].astype(jnp.bfloat16)                       # in-kernel cast
    h = jnp.dot(x, w1_ref[...], preferred_element_type=jnp.float32)
    h = _gelu(h + b1_ref[...])                                # f32 VPU + EUP
    # Dropout(p=0.0) is the identity.
    y = jnp.dot(h.astype(jnp.bfloat16), w2_ref[...],
                preferred_element_type=jnp.float32)
    o_ref[...] = (y + b2_ref[...]).astype(o_ref.dtype)


# ---------------------------------------------------------------------------
# Kernel B: hidden axis streamed in chunks; accumulate directly into o_ref
# (f32, constant block index over k -> stays resident across the k loop).
# ---------------------------------------------------------------------------
def _ffn_streamed_kernel(x_ref, w1_ref, b1_ref, w2_ref, b2_ref, o_ref):
    k = pl.program_id(1)

    @pl.when(k == 0)
    def _():
        o_ref[...] = jnp.zeros_like(o_ref)

    x = x_ref[...].astype(jnp.bfloat16)
    # Note: chunking `hidden` does NOT split the first matmul's contraction
    # (which is over `dim`), so GELU on each hidden chunk is exact; only the
    # second matmul's contraction over `hidden` is accumulated (in f32).
    h = jnp.dot(x, w1_ref[...], preferred_element_type=jnp.float32)
    h = _gelu(h + b1_ref[...])
    o_ref[...] += jnp.dot(h.astype(jnp.bfloat16), w2_ref[...],
                          preferred_element_type=jnp.float32)

    @pl.when(k == pl.num_programs(1) - 1)
    def _():
        o_ref[...] += b2_ref[...]


def _pick_tile(total, target, aligns=(256, 128, 8)):
    """Largest tile <= target that evenly divides `total`, preferring
    MXU-friendly alignments (256, then 128, then the minimal 8)."""
    if total <= target:
        return total
    for a in aligns:
        t = (target // a) * a
        while t >= a:
            if total % t == 0:
                return t
            t -= a
    return total  # awkward extent: fall back to one full block


def feed_forward(x, w1, b1, w2, b2, *,
                 row_tile=512, hidden_tile=1024,
                 vmem_limit_bytes=64 * 1024 * 1024,
                 weights_resident=None):
    """x: (..., dim) f32, w1: (dim, hidden), b1: (hidden,),
       w2: (hidden, dim), b2: (dim,).  Returns f32 (..., dim)."""
    orig_shape = x.shape
    D = orig_shape[-1]
    H = w1.shape[1]
    M = 1
    for s in orig_shape[:-1]:
        M *= s

    # x stays f32 (cast to bf16 inside the kernel); weights bf16; biases f32.
    x2d = x.reshape(M, D)
    w1b = w1.astype(jnp.bfloat16)
    w2b = w2.astype(jnp.bfloat16)
    b1f = b1.reshape(1, H).astype(jnp.float32)
    b2f = b2.reshape(1, D).astype(jnp.float32)

    # Decide whether both bf16 weights can live in VMEM with headroom for the
    # double-buffered x/out tiles and biases.
    weight_bytes = 2 * (D * H + H * D)  # bf16 -> 2 bytes/elem
    if weights_resident is None:
        weights_resident = weight_bytes <= vmem_limit_bytes // 2

    TM = _pick_tile(M, row_tile)
    compiler_kw = dict(vmem_limit_bytes=vmem_limit_bytes)

    if weights_resident:
        grid = (M // TM,)
        out = pl.pallas_call(
            _ffn_resident_kernel,
            out_shape=jax.ShapeDtypeStruct((M, D), jnp.float32),
            grid=grid,
            in_specs=[
                pl.BlockSpec((TM, D), lambda i: (i, 0)),   # x rows
                pl.BlockSpec((D, H), lambda i: (0, 0)),    # w1 (resident)
                pl.BlockSpec((1, H), lambda i: (0, 0)),    # b1 (resident)
                pl.BlockSpec((H, D), lambda i: (0, 0)),    # w2 (resident)
                pl.BlockSpec((1, D), lambda i: (0, 0)),    # b2 (resident)
            ],
            out_specs=pl.BlockSpec((TM, D), lambda i: (i, 0)),
            compiler_params=pltpu.CompilerParams(
                dimension_semantics=("parallel",), **compiler_kw),
        )(x2d, w1b, b1f, w2b, b2f)
    else:
        TH = _pick_tile(H, hidden_tile)
        grid = (M // TM, H // TH)
        out = pl.pallas_call(
            _ffn_streamed_kernel,
            out_shape=jax.ShapeDtypeStruct((M, D), jnp.float32),
            grid=grid,
            in_specs=[
                pl.BlockSpec((TM, D), lambda i, k: (i, 0)),  # x rows (resident over k)
                pl.BlockSpec((D, TH), lambda i, k: (0, k)),  # w1 hidden-chunk
                pl.BlockSpec((1, TH), lambda i, k: (0, k)),  # b1 hidden-chunk
                pl.BlockSpec((TH, D), lambda i, k: (k, 0)),  # w2 hidden-chunk
                pl.BlockSpec((1, D), lambda i, k: (0, 0)),   # b2 (constant)
            ],
            out_specs=pl.BlockSpec((TM, D), lambda i, k: (i, 0)),
            compiler_params=pltpu.CompilerParams(
                dimension_semantics=("parallel", "arbitrary"), **compiler_kw),
        )(x2d, w1b, b1f, w2b, b2f)

    return out.reshape(orig_shape)


def feed_forward_ref(x, w1, b1, w2, b2):
    """Plain-JAX reference with the same dtype handling / GELU as the kernel."""
    orig_shape = x.shape
    D = orig_shape[-1]
    x2d = x.reshape(-1, D).astype(jnp.bfloat16)
    h = jnp.dot(x2d, w1.astype(jnp.bfloat16),
                preferred_element_type=jnp.float32)
    h = _gelu(h + b1.reshape(1, -1).astype(jnp.float32))
    y = jnp.dot(h.astype(jnp.bfloat16), w2.astype(jnp.bfloat16),
                preferred_element_type=jnp.float32)
    y = y + b2.reshape(1, -1).astype(jnp.float32)
    return y.reshape(orig_shape)


if __name__ == "__main__":
    key = jax.random.PRNGKey(0)
    kx, kw1, kb1, kw2, kb2 = jax.random.split(key, 5)

    B, S, dim, hidden = 2, 16, 128, 512

    x = jax.random.normal(kx, (B, S, dim), dtype=jnp.float32)
    w1 = 0.02 * jax.random.normal(kw1, (dim, hidden), dtype=jnp.float32)
    b1 = 0.02 * jax.random.normal(kb1, (hidden,), dtype=jnp.float32)
    w2 = 0.02 * jax.random.normal(kw2, (hidden, dim), dtype=jnp.float32)
    b2 = 0.02 * jax.random.normal(kb2, (dim,), dtype=jnp.float32)

    y_ref = feed_forward_ref(x, w1, b1, w2, b2)

    # Fast path: weights VMEM-resident, 1-D row grid.
    y_res = feed_forward(x, w1, b1, w2, b2)
    jax.block_until_ready(y_res)
    assert y_res.shape == (B, S, dim)
    err_res = float(jnp.max(jnp.abs(y_res - y_ref)))
    assert err_res < 1e-2, f"resident kernel mismatch: max abs err {err_res}"

    # Streamed path: force hidden-chunking with a multi-step grid (2 x 2 here)
    # to exercise the accumulate-into-o_ref reduction as well.
    y_str = feed_forward(x, w1, b1, w2, b2, weights_resident=False,
                         row_tile=16, hidden_tile=256)
    jax.block_until_ready(y_str)
    err_str = float(jnp.max(jnp.abs(y_str - y_ref)))
    assert err_str < 1e-2, f"streamed kernel mismatch: max abs err {err_str}"

    print("KERNEL_OK")
</pallas_src>

<mosaic_0001>
module attributes {stable_mosaic.version = 11 : i64} {
  func.func @_ffn_resident_kernel(%arg0: i32, %arg1: memref<32x128xf32, #tpu.memory_space<vmem>>, %arg2: memref<128x512xbf16, #tpu.memory_space<vmem>>, %arg3: memref<1x512xf32, #tpu.memory_space<vmem>>, %arg4: memref<512x128xbf16, #tpu.memory_space<vmem>>, %arg5: memref<1x128xf32, #tpu.memory_space<vmem>>, %arg6: memref<32x128xf32, #tpu.memory_space<vmem>>) attributes {dimension_semantics = [#tpu.dimension_semantics<parallel>], iteration_bounds = array<i64: 1>, scalar_prefetch = 0 : i64, scratch_operands = 0 : i64, tpu.core_type = #tpu.core_type<tc>, window_params = [{transform_indices = @transform_0, window_bounds = array<i64: 32, 128>}, {pipeline_mode = #tpu.pipeline_mode<synchronous>, transform_indices = @transform_1, window_bounds = array<i64: 128, 512>}, {pipeline_mode = #tpu.pipeline_mode<synchronous>, transform_indices = @transform_2, window_bounds = array<i64: 1, 512>}, {pipeline_mode = #tpu.pipeline_mode<synchronous>, transform_indices = @transform_3, window_bounds = array<i64: 512, 128>}, {pipeline_mode = #tpu.pipeline_mode<synchronous>, transform_indices = @transform_4, window_bounds = array<i64: 1, 128>}, {transform_indices = @transform_5, window_bounds = array<i64: 32, 128>}]} {
    %c0 = arith.constant 0 : index
    %c0_0 = arith.constant 0 : index
    %0 = vector.load %arg1[%c0, %c0_0] : memref<32x128xf32, #tpu.memory_space<vmem>>, vector<32x128xf32>
    %1 = arith.truncf %0 : vector<32x128xf32> to vector<32x128xbf16>
    %c0_1 = arith.constant 0 : index
    %c0_2 = arith.constant 0 : index
    %2 = vector.load %arg2[%c0_1, %c0_2] : memref<128x512xbf16, #tpu.memory_space<vmem>>, vector<128x512xbf16>
    %cst = arith.constant dense<0.000000e+00> : vector<32x512xf32>
    %3 = tpu.matmul %1, %2, %cst {dimension_numbers = #tpu.dot_dimension_numbers<[1], [0], [0], [1], [0, 0, 1, 1], [], []>} : vector<32x128xbf16>, vector<128x512xbf16>, vector<32x512xf32> -> vector<32x512xf32>
    %c0_3 = arith.constant 0 : index
    %c0_4 = arith.constant 0 : index
    %4 = vector.load %arg3[%c0_3, %c0_4] : memref<1x512xf32, #tpu.memory_space<vmem>>, vector<1x512xf32>
    %5 = vector.broadcast %4 : vector<1x512xf32> to vector<32x512xf32>
    %6 = arith.addf %3, %5 : vector<32x512xf32>
    %7 = arith.mulf %6, %6 : vector<32x512xf32>
    %8 = arith.mulf %6, %7 : vector<32x512xf32>
    %cst_5 = arith.constant 4.471500e-02 : f32
    %9 = vector.broadcast %cst_5 : f32 to vector<32x512xf32>
    %10 = arith.mulf %9, %8 : vector<32x512xf32>
    %11 = arith.addf %6, %10 : vector<32x512xf32>
    %cst_6 = arith.constant 0.797884583 : f32
    %12 = vector.broadcast %cst_6 : f32 to vector<32x512xf32>
    %13 = arith.mulf %12, %11 : vector<32x512xf32>
    %14 = math.tanh %13 : vector<32x512xf32>
    %cst_7 = arith.constant 1.000000e+00 : f32
    %15 = vector.broadcast %cst_7 : f32 to vector<32x512xf32>
    %16 = arith.addf %15, %14 : vector<32x512xf32>
    %cst_8 = arith.constant 5.000000e-01 : f32
    %17 = vector.broadcast %cst_8 : f32 to vector<32x512xf32>
    %18 = arith.mulf %17, %16 : vector<32x512xf32>
    %19 = arith.mulf %6, %18 : vector<32x512xf32>
    %20 = arith.truncf %19 : vector<32x512xf32> to vector<32x512xbf16>
    %c0_9 = arith.constant 0 : index
    %c0_10 = arith.constant 0 : index
    %21 = vector.load %arg4[%c0_9, %c0_10] : memref<512x128xbf16, #tpu.memory_space<vmem>>, vector<512x128xbf16>
    %cst_11 = arith.constant dense<0.000000e+00> : vector<32x128xf32>
    %22 = tpu.matmul %20, %21, %cst_11 {dimension_numbers = #tpu.dot_dimension_numbers<[1], [0], [0], [1], [0, 0, 1, 1], [], []>} : vector<32x512xbf16>, vector<512x128xbf16>, vector<32x128xf32> -> vector<32x128xf32>
    %c0_12 = arith.constant 0 : index
    %c0_13 = arith.constant 0 : index
    %23 = vector.load %arg5[%c0_12, %c0_13] : memref<1x128xf32, #tpu.memory_space<vmem>>, vector<1x128xf32>
    %24 = vector.broadcast %23 : vector<1x128xf32> to vector<32x128xf32>
    %25 = arith.addf %22, %24 : vector<32x128xf32>
    %c0_14 = arith.constant 0 : index
    %c0_15 = arith.constant 0 : index
    %26 = vector.load %arg6[%c0_14, %c0_15] : memref<32x128xf32, #tpu.memory_space<vmem>>, vector<32x128xf32>
    tpu.vector_store %arg6[%c0_14, %c0_15], %25 {strides = array<i32>} : memref<32x128xf32, #tpu.memory_space<vmem>>, vector<32x128xf32>,
    return
  }
  func.func @transform_0(%arg0: i32) -> (i32, i32) {
    %c0_i32 = arith.constant 0 : i32
    %c0_i32_0 = arith.constant 0 : i32
    return %arg0, %c0_i32 : i32, i32
  }
  func.func @transform_1(%arg0: i32) -> (i32, i32) {
    %c0_i32 = arith.constant 0 : i32
    %c0_i32_0 = arith.constant 0 : i32
    %c0_i32_1 = arith.constant 0 : i32
    return %c0_i32, %c0_i32_0 : i32, i32
  }
  func.func @transform_2(%arg0: i32) -> (i32, i32) {
    %c0_i32 = arith.constant 0 : i32
    %c0_i32_0 = arith.constant 0 : i32
    %c0_i32_1 = arith.constant 0 : i32
    return %c0_i32, %c0_i32_0 : i32, i32
  }
  func.func @transform_3(%arg0: i32) -> (i32, i32) {
    %c0_i32 = arith.constant 0 : i32
    %c0_i32_0 = arith.constant 0 : i32
    %c0_i32_1 = arith.constant 0 : i32
    return %c0_i32, %c0_i32_0 : i32, i32
  }
  func.func @transform_4(%arg0: i32) -> (i32, i32) {
    %c0_i32 = arith.constant 0 : i32
    %c0_i32_0 = arith.constant 0 : i32
    %c0_i32_1 = arith.constant 0 : i32
    return %c0_i32, %c0_i32_0 : i32, i32
  }
  func.func @transform_5(%arg0: i32) -> (i32, i32) {
    %c0_i32 = arith.constant 0 : i32
    %c0_i32_0 = arith.constant 0 : i32
    return %arg0, %c0_i32 : i32, i32
  }
}

</mosaic_0001>

<llo_original>
// kernel: tpu_custom_call.1
$region0: #{tpu_custom_call.1}
  #allocation0 [shape = 'u32[]', space=smem, size = 0x4, offset = 0x4, fixed_abs, tag = 'smem constant byte address 0x4 - core index']
  #allocation1 [shape = 'u32[144,128]{1,0:T(1,128)}', space=vmem, size = 0x12000, scoped, tag = 'internal scratch']
  %s0 = inlined_call_operand.hbm [shape: f32[32,128], index: 0, kind: input, shape index: {}]
  %s1 = inlined_call_operand.hbm [shape: bf16[128,512], index: 1, kind: input, shape index: {}]
  %s2 = inlined_call_operand.hbm [shape: f32[1,512], index: 2, kind: input, shape index: {}]
  %s3 = inlined_call_operand.hbm [shape: bf16[512,128], index: 3, kind: input, shape index: {}]
  %s4 = inlined_call_operand.hbm [shape: f32[1,128], index: 4, kind: input, shape index: {}]
  %s5 = inlined_call_operand.hbm [shape: f32[32,128], index: 5, kind: output, shape index: {}]
  %s6 = sld [smem:[#allocation0]]
  $region50: #{tpu_custom_call.1} parent=0
    _
  %s8 = ssub.s32 1, %s6
  %s9 = scalar_select 0, %s8, %s6
  $region1: #{tpu_custom_call.1} parent=0
    #allocation2 [shape = 'u8[16384]{0}', space=vmem, size = 0x4000, scoped, tag = 'input window, operand 0, single buffered']
    #allocation3 [shape = 's32[1]{0}', space=sflag, size = 0x4, scoped, tag = 'scoped memory for tpu_custom_call.1']
    #allocation4 [shape = 's32[1]{0}', space=sflag, size = 0x4, scoped, tag = 'scoped memory for tpu_custom_call.1']
    #allocation5 [shape = 'u8[131072]{0}', space=vmem, size = 0x20000, scoped, tag = 'input window, operand 1, single buffered']
    #allocation6 [shape = 's32[1]{0}', space=sflag, size = 0x4, scoped, tag = 'scoped memory for tpu_custom_call.1']
    #allocation7 [shape = 'u8[2048]{0}', space=vmem, size = 0x800, scoped, tag = 'input window, operand 2, single buffered']
    #allocation8 [shape = 'u8[131072]{0}', space=vmem, size = 0x20000, scoped, tag = 'input window, operand 3, single buffered']
    #allocation9 [shape = 's32[1]{0}', space=sflag, size = 0x4, scoped, tag = 'scoped memory for tpu_custom_call.1']
    #allocation10 [shape = 'u8[512]{0}', space=vmem, size = 0x400, scoped, tag = 'input window, operand 4, single buffered']
    #allocation11 [shape = 'u8[16384]{0}', space=vmem, size = 0x4000, scoped, tag = 'output window, operand 0, single buffered']
    %10 = vsyncpa [#allocation3], 0
    %11 = vsyncpa [#allocation6], 0
    %12 = vsyncpa [#allocation9], 0
    %13 = vsyncpa [#allocation4], 0
    // Predicated region
    $region2: #{tpu_custom_call.1} parent=1 // pred_check
      _
    $region3: #{tpu_custom_call.1} parent=1 // pred_check_branch
      %15 = sbr.rel (0) target = $region5
    $region4: #{tpu_custom_call.1} parent=1 // pred_region
      %s17 = ssub.s32 512, 512
      %18 = vsyncadd [#allocation3], %s17
      %s19 = sshll.u32 [#allocation2], 4
      %s20 = int_to_ptr.vmem [resolvable:$true] %s19
      %25 = dma.hbm_to_vmem [thread:$0]  %s0, 512, %s20, [#allocation3], 128, 128, 8
    $region5: #{tpu_custom_call.1} parent=1 // pred_fallthru
      _
    // Predicated region
    $region6: #{tpu_custom_call.1} parent=1 // pred_check
      _
    $region7: #{tpu_custom_call.1} parent=1 // pred_check_branch
      %27 = sbr.rel (0) target = $region9
    $region8: #{tpu_custom_call.1} parent=1 // pred_region
      %s29 = ssub.s32 4096, 4096
      %30 = vsyncadd [#allocation6], %s29
      %s31 = sshll.u32 [#allocation5], 4
      %s32 = int_to_ptr.vmem [resolvable:$true] %s31
      %37 = dma.hbm_to_vmem [thread:$0]  %s1, 4096, %s32, [#allocation6], 256, 256, 16
    $region9: #{tpu_custom_call.1} parent=1 // pred_fallthru
      _
    // Predicated region
    $region10: #{tpu_custom_call.1} parent=1 // pred_check
      _
    $region11: #{tpu_custom_call.1} parent=1 // pred_check_branch
      %39 = sbr.rel (0) target = $region13
    $region12: #{tpu_custom_call.1} parent=1 // pred_region
      %s41 = ssub.s32 64, 64
      %42 = vsyncadd [#allocation6], %s41
      %s44 = sshll.u32 [#allocation7], 4
      %s45 = int_to_ptr.vmem [resolvable:$true] %s44
      %47 = dma.hbm_to_vmem [thread:$0]  %s2, 64, %s45, [#allocation6]
    $region13: #{tpu_custom_call.1} parent=1 // pred_fallthru
      _
    // Predicated region
    $region14: #{tpu_custom_call.1} parent=1 // pred_check
      _
    $region15: #{tpu_custom_call.1} parent=1 // pred_check_branch
      %49 = sbr.rel (0) target = $region17
    $region16: #{tpu_custom_call.1} parent=1 // pred_region
      %s51 = ssub.s32 4096, 4096
      %52 = vsyncadd [#allocation9], %s51
      %s53 = sshll.u32 [#allocation8], 4
      %s54 = int_to_ptr.vmem [resolvable:$true] %s53
      %59 = dma.hbm_to_vmem [thread:$0]  %s3, 4096, %s54, [#allocation9], 64, 64, 4
    $region17: #{tpu_custom_call.1} parent=1 // pred_fallthru
      _
    // Predicated region
    $region18: #{tpu_custom_call.1} parent=1 // pred_check
      _
    $region19: #{tpu_custom_call.1} parent=1 // pred_check_branch
      %61 = sbr.rel (0) target = $region21
    $region20: #{tpu_custom_call.1} parent=1 // pred_region
      %s63 = ssub.s32 16, 16
      %64 = vsyncadd [#allocation9], %s63
      %s66 = sshll.u32 [#allocation10], 4
      %s67 = int_to_ptr.vmem [resolvable:$true] %s66
      %69 = dma.hbm_to_vmem [thread:$0]  %s4, 16, %s67, [#allocation9]
    $region21: #{tpu_custom_call.1} parent=1 // pred_fallthru
      _
    // Predicated region
    $region22: #{tpu_custom_call.1} parent=1 // pred_check
      _
    $region23: #{tpu_custom_call.1} parent=1 // pred_check_branch
      %71 = sbr.rel (0) target = $region25
    $region24: #{tpu_custom_call.1} parent=1 // pred_region
      %72 = dma.done [#allocation3], 512
    $region25: #{tpu_custom_call.1} parent=1 // pred_fallthru
      _
    // Predicated region
    $region26: #{tpu_custom_call.1} parent=1 // pred_check
      _
    $region27: #{tpu_custom_call.1} parent=1 // pred_check_branch
      %74 = sbr.rel (0) target = $region29
    $region28: #{tpu_custom_call.1} parent=1 // pred_region
      %75 = dma.done [#allocation6], 4096
    $region29: #{tpu_custom_call.1} parent=1 // pred_fallthru
      _
    // Predicated region
    $region30: #{tpu_custom_call.1} parent=1 // pred_check
      _
    $region31: #{tpu_custom_call.1} parent=1 // pred_check_branch
      %77 = sbr.rel (0) target = $region33
    $region32: #{tpu_custom_call.1} parent=1 // pred_region
      %78 = dma.done [#allocation6], 64
    $region33: #{tpu_custom_call.1} parent=1 // pred_fallthru
      _
    // Predicated region
    $region34: #{tpu_custom_call.1} parent=1 // pred_check
      _
    $region35: #{tpu_custom_call.1} parent=1 // pred_check_branch
      %80 = sbr.rel (0) target = $region37
    $region36: #{tpu_custom_call.1} parent=1 // pred_region
      %81 = dma.done [#allocation9], 4096
    $region37: #{tpu_custom_call.1} parent=1 // pred_fallthru
      _
    // Predicated region
    $region38: #{tpu_custom_call.1} parent=1 // pred_check
      _
    $region39: #{tpu_custom_call.1} parent=1 // pred_check_branch
      %83 = sbr.rel (0) target = $region41
    $region40: #{tpu_custom_call.1} parent=1 // pred_region
      %84 = dma.done [#allocation9], 16
    $region41: #{tpu_custom_call.1} parent=1 // pred_fallthru
      _
    %v86 = vld [vmem:[#allocation2] sm:$0xff]
    %v87 = vld [vmem:[#allocation2 + $0x8] sm:$0xff]
    %v88 = vld [vmem:[#allocation2 + $0x10] sm:$0xff]
    %v89 = vld [vmem:[#allocation2 + $0x18] sm:$0xff]
    %v90 = vpack.c.bf16 %v87, %v86
    %v91 = vpack.c.bf16 %v89, %v88
    %v92 = vld [vmem:[#allocation5] sm:$0xff]
    %v93 = vld [vmem:[#allocation5 + $0x8] sm:$0xff]
    %v94 = vld [vmem:[#allocation5 + $0x10] sm:$0xff]
    %v95 = vld [vmem:[#allocation5 + $0x18] sm:$0xff]
    %v96 = vld [vmem:[#allocation5 + $0x20] sm:$0xff]
    %v97 = vld [vmem:[#allocation5 + $0x28] sm:$0xff]
    %v98 = vld [vmem:[#allocation5 + $0x30] sm:$0xff]
    %v99 = vld [vmem:[#allocation5 + $0x38] sm:$0xff]
    %v100 = vld [vmem:[#allocation5 + $0x40] sm:$0xff]
    %v101 = vld [vmem:[#allocation5 + $0x48] sm:$0xff]
    %v102 = vld [vmem:[#allocation5 + $0x50] sm:$0xff]
    %v103 = vld [vmem:[#allocation5 + $0x58] sm:$0xff]
    %v104 = vld [vmem:[#allocation5 + $0x60] sm:$0xff]
    %v105 = vld [vmem:[#allocation5 + $0x68] sm:$0xff]
    %v106 = vld [vmem:[#allocation5 + $0x70] sm:$0xff]
    %v107 = vld [vmem:[#allocation5 + $0x78] sm:$0xff]
    %v108 = vld [vmem:[#allocation5 + $0x80] sm:$0xff]
    %v109 = vld [vmem:[#allocation5 + $0x88] sm:$0xff]
    %v110 = vld [vmem:[#allocation5 + $0x90] sm:$0xff]
    %v111 = vld [vmem:[#allocation5 + $0x98] sm:$0xff]
    %v112 = vld [vmem:[#allocation5 + $0xa0] sm:$0xff]
    %v113 = vld [vmem:[#allocation5 + $0xa8] sm:$0xff]
    %v114 = vld [vmem:[#allocation5 + $0xb0] sm:$0xff]
    %v115 = vld [vmem:[#allocation5 + $0xb8] sm:$0xff]
    %v116 = vld [vmem:[#allocation5 + $0xc0] sm:$0xff]
    %v117 = vld [vmem:[#allocation5 + $0xc8] sm:$0xff]
    %v118 = vld [vmem:[#allocation5 + $0xd0] sm:$0xff]
    %v119 = vld [vmem:[#allocation5 + $0xd8] sm:$0xff]
    %v120 = vld [vmem:[#allocation5 + $0xe0] sm:$0xff]
    %v121 = vld [vmem:[#allocation5 + $0xe8] sm:$0xff]
    %v122 = vld [vmem:[#allocation5 + $0xf0] sm:$0xff]
    %v123 = vld [vmem:[#allocation5 + $0xf8] sm:$0xff]
    %v124 = vld [vmem:[#allocation7] sm:$0xf]
    %v126 = vlaneseq
    %v127 = vshrl.u32 %v126, 7
    %v128 = vsub.s32 0, %v127
    %v129 = vrot.slane %v124, %v128
    %v130 = vlaneseq
    %v131 = vshrl.u32 %v130, 7
    %v132 = vsub.s32 1, %v131
    %v133 = vrot.slane %v124, %v132
    %v134 = vlaneseq
    %v135 = vshrl.u32 %v134, 7
    %v136 = vsub.s32 2, %v135
    %v137 = vrot.slane %v124, %v136
    %v138 = vlaneseq
    %v139 = vshrl.u32 %v138, 7
    %v140 = vsub.s32 3, %v139
    %v141 = vrot.slane %v124, %v140
    %v178 = vunpack.c.l.b16 %v92
    %v179 = vunpack.c.h.b16 %v92
    %v180 = vunpack.c.l.b16 %v93
    %v181 = vunpack.c.h.b16 %v93
    %v182 = vunpack.c.l.b16 %v94
    %v183 = vunpack.c.h.b16 %v94
    %v184 = vunpack.c.l.b16 %v95
    %v185 = vunpack.c.h.b16 %v95
    %v186 = vunpack.c.l.b16 %v96
    %v187 = vunpack.c.h.b16 %v96
    %v188 = vunpack.c.l.b16 %v97
    %v189 = vunpack.c.h.b16 %v97
    %v190 = vunpack.c.l.b16 %v98
    %v191 = vunpack.c.h.b16 %v98
    %v192 = vunpack.c.l.b16 %v99
    %v193 = vunpack.c.h.b16 %v99
    %v194 = vunpack.c.l.b16 %v100
    %v195 = vunpack.c.h.b16 %v100
    %v196 = vunpack.c.l.b16 %v101
    %v197 = vunpack.c.h.b16 %v101
    %v198 = vunpack.c.l.b16 %v102
    %v199 = vunpack.c.h.b16 %v102
    %v200 = vunpack.c.l.b16 %v103
    %v201 = vunpack.c.h.b16 %v103
    %v202 = vunpack.c.l.b16 %v104
    %v203 = vunpack.c.h.b16 %v104
    %v204 = vunpack.c.l.b16 %v105
    %v205 = vunpack.c.h.b16 %v105
    %v206 = vunpack.c.l.b16 %v106
    %v207 = vunpack.c.h.b16 %v106
    %v208 = vunpack.c.l.b16 %v107
    %v209 = vunpack.c.h.b16 %v107
    %v210 = vunpack.c.l.b16 %v108
    %v211 = vunpack.c.h.b16 %v108
    %v212 = vunpack.c.l.b16 %v109
    %v213 = vunpack.c.h.b16 %v109
    %v214 = vunpack.c.l.b16 %v110
    %v215 = vunpack.c.h.b16 %v110
    %v216 = vunpack.c.l.b16 %v111
    %v217 = vunpack.c.h.b16 %v111
    %v218 = vunpack.c.l.b16 %v112
    %v219 = vunpack.c.h.b16 %v112
    %v220 = vunpack.c.l.b16 %v113
    %v221 = vunpack.c.h.b16 %v113
    %v222 = vunpack.c.l.b16 %v114
    %v223 = vunpack.c.h.b16 %v114
    %v224 = vunpack.c.l.b16 %v115
    %v225 = vunpack.c.h.b16 %v115
    %v226 = vunpack.c.l.b16 %v116
    %v227 = vunpack.c.h.b16 %v116
    %v228 = vunpack.c.l.b16 %v117
    %v229 = vunpack.c.h.b16 %v117
    %v230 = vunpack.c.l.b16 %v118
    %v231 = vunpack.c.h.b16 %v118
    %v232 = vunpack.c.l.b16 %v119
    %v233 = vunpack.c.h.b16 %v119
    %v234 = vunpack.c.l.b16 %v120
    %v235 = vunpack.c.h.b16 %v120
    %v236 = vunpack.c.l.b16 %v121
    %v237 = vunpack.c.h.b16 %v121
    %v238 = vunpack.c.l.b16 %v122
    %v239 = vunpack.c.h.b16 %v122
    %v240 = vunpack.c.l.b16 %v123
    %v241 = vunpack.c.h.b16 %v123
    %v242 = vpack.c.b16 %v182, %v178
    %v243 = vpack.c.b16 %v183, %v179
    %v244 = vpack.c.b16 %v184, %v180
    %v245 = vpack.c.b16 %v185, %v181
    %v246 = vpack.c.b16 %v190, %v186
    %v247 = vpack.c.b16 %v191, %v187
    %v248 = vpack.c.b16 %v192, %v188
    %v249 = vpack.c.b16 %v193, %v189
    %v250 = vpack.c.b16 %v198, %v194
    %v251 = vpack.c.b16 %v199, %v195
    %v252 = vpack.c.b16 %v200, %v196
    %v253 = vpack.c.b16 %v201, %v197
    %v254 = vpack.c.b16 %v206, %v202
    %v255 = vpack.c.b16 %v207, %v203
    %v256 = vpack.c.b16 %v208, %v204
    %v257 = vpack.c.b16 %v209, %v205
    %v258 = vpack.c.b16 %v214, %v210
    %v259 = vpack.c.b16 %v215, %v211
    %v260 = vpack.c.b16 %v216, %v212
    %v261 = vpack.c.b16 %v217, %v213
    %v262 = vpack.c.b16 %v222, %v218
    %v263 = vpack.c.b16 %v223, %v219
    %v264 = vpack.c.b16 %v224, %v220
    %v265 = vpack.c.b16 %v225, %v221
    %v266 = vpack.c.b16 %v230, %v226
    %v267 = vpack.c.b16 %v231, %v227
    %v268 = vpack.c.b16 %v232, %v228
    %v269 = vpack.c.b16 %v233, %v229
    %v270 = vpack.c.b16 %v238, %v234
    %v271 = vpack.c.b16 %v239, %v235
    %v272 = vpack.c.b16 %v240, %v236
    %v273 = vpack.c.b16 %v241, %v237
    %306 = vmatprep.subr.bf16.mxu0 %v243
    %307 = vmatpush1.bf16.msra.mxu0 %v242
    %308 = vmatprep.subr.bf16.mxu0 %v247
    %309 = vmatpush1.bf16.msra.mxu0 %v246
    %310 = vmatprep.subr.bf16.mxu0 %v251
    %311 = vmatpush1.bf16.msra.mxu0 %v250
    %312 = vmatprep.subr.bf16.mxu0 %v255
    %313 = vmatpush1.bf16.msra.mxu0 %v254
    %314 = vmatprep.subr.bf16.mxu0 %v259
    %315 = vmatpush1.bf16.msra.mxu0 %v258
    %316 = vmatprep.subr.bf16.mxu0 %v263
    %317 = vmatpush1.bf16.msra.mxu0 %v262
    %318 = vmatprep.subr.bf16.mxu0 %v267
    %319 = vmatpush1.bf16.msra.mxu0 %v266
    %320 = vmatprep.subr.bf16.mxu0 %v271
    %321 = vmatpush1.bf16.msra.mxu0 %v270
    %322 = vmatprep.subr.bf16.mxu0 0
    %323 = vmatpush1.bf16.msra.mxu0 0
    %324 = vmatprep.subr.bf16.mxu0 0
    %325 = vmatpush1.bf16.msra.mxu0 0
    %326 = vmatprep.subr.bf16.mxu0 0
    %327 = vmatpush1.bf16.msra.mxu0 0
    %328 = vmatprep.subr.bf16.mxu0 0
    %329 = vmatpush1.bf16.msra.mxu0 0
    %330 = vmatprep.subr.bf16.mxu0 0
    %331 = vmatpush1.bf16.msra.mxu0 0
    %332 = vmatprep.subr.bf16.mxu0 0
    %333 = vmatpush1.bf16.msra.mxu0 0
    %334 = vmatprep.subr.bf16.mxu0 0
    %335 = vmatpush1.bf16.msra.mxu0 0
    %336 = vmatprep.subr.bf16.mxu0 0
    %337 = vmatpush1.bf16.msra.mxu0 0
    %338 = vmatprep.mubr.bf16.mxu0 0
    %339 = vmatmul.mubr.bf16.gmra.mrb[0].mxu0 %v90
    %v340 = vpop.f32.mrb[0].mxu0
    %v341 = vadd.f32 %v129, %v340
    %v342 = vpop.f32.mrb[0].mxu0
    %v343 = vadd.f32 %v133, %v342
    %v344 = vpop.f32.mrb[0].mxu0
    %v345 = vadd.f32 %v129, %v344
    %v346 = vpop.f32.mrb[0].mxu0
    %v347 = vadd.f32 %v133, %v346
    %348 = vmatprep.mubr.bf16.mxu0 0
    %349 = vmatmul.mubr.bf16.gmra.mrb[0].mxu0 %v91
    %v350 = vpop.f32.mrb[0].mxu0
    %v351 = vadd.f32 %v129, %v350
    %v352 = vpop.f32.mrb[0].mxu0
    %v353 = vadd.f32 %v133, %v352
    %v354 = vpop.f32.mrb[0].mxu0
    %v355 = vadd.f32 %v129, %v354
    %v356 = vpop.f32.mrb[0].mxu0
    %v357 = vadd.f32 %v133, %v356
    %358 = vdwg.mxu0
    %359 = vmatprep.subr.bf16.mxu0 %v245
    %360 = vmatpush1.bf16.msra.mxu0 %v244
    %361 = vmatprep.subr.bf16.mxu0 %v249
    %362 = vmatpush1.bf16.msra.mxu0 %v248
    %363 = vmatprep.subr.bf16.mxu0 %v253
    %364 = vmatpush1.bf16.msra.mxu0 %v252
    %365 = vmatprep.subr.bf16.mxu0 %v257
    %366 = vmatpush1.bf16.msra.mxu0 %v256
    %367 = vmatprep.subr.bf16.mxu0 %v261
    %368 = vmatpush1.bf16.msra.mxu0 %v260
    %369 = vmatprep.subr.bf16.mxu0 %v265
    %370 = vmatpush1.bf16.msra.mxu0 %v264
    %371 = vmatprep.subr.bf16.mxu0 %v269
    %372 = vmatpush1.bf16.msra.mxu0 %v268
    %373 = vmatprep.subr.bf16.mxu0 %v273
    %374 = vmatpush1.bf16.msra.mxu0 %v272
    %375 = vmatprep.subr.bf16.mxu0 0
    %376 = vmatpush1.bf16.msra.mxu0 0
    %377 = vmatprep.subr.bf16.mxu0 0
    %378 = vmatpush1.bf16.msra.mxu0 0
    %379 = vmatprep.subr.bf16.mxu0 0
    %380 = vmatpush1.bf16.msra.mxu0 0
    %381 = vmatprep.subr.bf16.mxu0 0
    %382 = vmatpush1.bf16.msra.mxu0 0
    %383 = vmatprep.subr.bf16.mxu0 0
    %384 = vmatpush1.bf16.msra.mxu0 0
    %385 = vmatprep.subr.bf16.mxu0 0
    %386 = vmatpush1.bf16.msra.mxu0 0
    %387 = vmatprep.subr.bf16.mxu0 0
    %388 = vmatpush1.bf16.msra.mxu0 0
    %389 = vmatprep.subr.bf16.mxu0 0
    %390 = vmatpush1.bf16.msra.mxu0 0
    %391 = vmatprep.mubr.bf16.mxu0 0
    %392 = vmatmul.mubr.bf16.gmra.mrb[0].mxu0 %v90
    %v393 = vpop.f32.mrb[0].mxu0
    %v394 = vadd.f32 %v137, %v393
    %v395 = vpop.f32.mrb[0].mxu0
    %v396 = vadd.f32 %v141, %v395
    %v397 = vpop.f32.mrb[0].mxu0
    %v398 = vadd.f32 %v137, %v397
    %v399 = vpop.f32.mrb[0].mxu0
    %v400 = vadd.f32 %v141, %v399
    %401 = vmatprep.mubr.bf16.mxu0 0
    %402 = vmatmul.mubr.bf16.gmra.mrb[0].mxu0 %v91
    %v403 = vpop.f32.mrb[0].mxu0
    %v404 = vadd.f32 %v137, %v403
    %v405 = vpop.f32.mrb[0].mxu0
    %v406 = vadd.f32 %v141, %v405
    %v407 = vpop.f32.mrb[0].mxu0
    %v408 = vadd.f32 %v137, %v407
    %v409 = vpop.f32.mrb[0].mxu0
    %v410 = vadd.f32 %v141, %v409
    %411 = vdwg.mxu0
    %v412 = vmul.f32 %v341, %v341
    %v413 = vmul.f32 %v343, %v343
    %v414 = vmul.f32 %v394, %v394
    %v415 = vmul.f32 %v396, %v396
    %v416 = vmul.f32 %v345, %v345
    %v417 = vmul.f32 %v347, %v347
    %v418 = vmul.f32 %v398, %v398
    %v419 = vmul.f32 %v400, %v400
    %v420 = vmul.f32 %v351, %v351
    %v421 = vmul.f32 %v353, %v353
    %v422 = vmul.f32 %v404, %v404
    %v423 = vmul.f32 %v406, %v406
    %v424 = vmul.f32 %v355, %v355
    %v425 = vmul.f32 %v357, %v357
    %v426 = vmul.f32 %v408, %v408
    %v427 = vmul.f32 %v410, %v410
    %v428 = vmul.f32 %v341, %v412
    %v429 = vmul.f32 %v343, %v413
    %v430 = vmul.f32 %v394, %v414
    %v431 = vmul.f32 %v396, %v415
    %v432 = vmul.f32 %v345, %v416
    %v433 = vmul.f32 %v347, %v417
    %v434 = vmul.f32 %v398, %v418
    %v435 = vmul.f32 %v400, %v419
    %v436 = vmul.f32 %v351, %v420
    %v437 = vmul.f32 %v353, %v421
    %v438 = vmul.f32 %v404, %v422
    %v439 = vmul.f32 %v406, %v423
    %v440 = vmul.f32 %v355, %v424
    %v441 = vmul.f32 %v357, %v425
    %v442 = vmul.f32 %v408, %v426
    %v443 = vmul.f32 %v410, %v427
    %v444 = vmul.f32 %v428, 0.044715
    %v445 = vmul.f32 %v429, 0.044715
    %v446 = vmul.f32 %v430, 0.044715
    %v447 = vmul.f32 %v431, 0.044715
    %v448 = vmul.f32 %v432, 0.044715
    %v449 = vmul.f32 %v433, 0.044715
    %v450 = vmul.f32 %v434, 0.044715
    %v451 = vmul.f32 %v435, 0.044715
    %v452 = vmul.f32 %v436, 0.044715
    %v453 = vmul.f32 %v437, 0.044715
    %v454 = vmul.f32 %v438, 0.044715
    %v455 = vmul.f32 %v439, 0.044715
    %v456 = vmul.f32 %v440, 0.044715
    %v457 = vmul.f32 %v441, 0.044715
    %v458 = vmul.f32 %v442, 0.044715
    %v459 = vmul.f32 %v443, 0.044715
    %v460 = vadd.f32 %v341, %v444
    %v461 = vadd.f32 %v343, %v445
    %v462 = vadd.f32 %v394, %v446
    %v463 = vadd.f32 %v396, %v447
    %v464 = vadd.f32 %v345, %v448
    %v465 = vadd.f32 %v347, %v449
    %v466 = vadd.f32 %v398, %v450
    %v467 = vadd.f32 %v400, %v451
    %v468 = vadd.f32 %v351, %v452
    %v469 = vadd.f32 %v353, %v453
    %v470 = vadd.f32 %v404, %v454
    %v471 = vadd.f32 %v406, %v455
    %v472 = vadd.f32 %v355, %v456
    %v473 = vadd.f32 %v357, %v457
    %v474 = vadd.f32 %v408, %v458
    %v475 = vadd.f32 %v410, %v459
    %v476 = vmul.f32 %v460, 0.7978846
    %v477 = vmul.f32 %v461, 0.7978846
    %v478 = vmul.f32 %v462, 0.7978846
    %v479 = vmul.f32 %v463, 0.7978846
    %v480 = vmul.f32 %v464, 0.7978846
    %v481 = vmul.f32 %v465, 0.7978846
    %v482 = vmul.f32 %v466, 0.7978846
    %v483 = vmul.f32 %v467, 0.7978846
    %v484 = vmul.f32 %v468, 0.7978846
    %v485 = vmul.f32 %v469, 0.7978846
    %v486 = vmul.f32 %v470, 0.7978846
    %v487 = vmul.f32 %v471, 0.7978846
    %v488 = vmul.f32 %v472, 0.7978846
    %v489 = vmul.f32 %v473, 0.7978846
    %v490 = vmul.f32 %v474, 0.7978846
    %v491 = vmul.f32 %v475, 0.7978846
    %v492 = vtanh.pop %v476
    %v493 = vtanh.pop %v477
    %v494 = vtanh.pop %v478
    %v495 = vtanh.pop %v479
    %v496 = vtanh.pop %v480
    %v497 = vtanh.pop %v481
    %v498 = vtanh.pop %v482
    %v499 = vtanh.pop %v483
    %v500 = vtanh.pop %v484
    %v501 = vtanh.pop %v485
    %v502 = vtanh.pop %v486
    %v503 = vtanh.pop %v487
    %v504 = vtanh.pop %v488
    %v505 = vtanh.pop %v489
    %v506 = vtanh.pop %v490
    %v507 = vtanh.pop %v491
    %v508 = vadd.f32 %v492, 1.0
    %v509 = vadd.f32 %v493, 1.0
    %v510 = vadd.f32 %v494, 1.0
    %v511 = vadd.f32 %v495, 1.0
    %v512 = vadd.f32 %v496, 1.0
    %v513 = vadd.f32 %v497, 1.0
    %v514 = vadd.f32 %v498, 1.0
    %v515 = vadd.f32 %v499, 1.0
    %v516 = vadd.f32 %v500, 1.0
    %v517 = vadd.f32 %v501, 1.0
    %v518 = vadd.f32 %v502, 1.0
    %v519 = vadd.f32 %v503, 1.0
    %v520 = vadd.f32 %v504, 1.0
    %v521 = vadd.f32 %v505, 1.0
    %v522 = vadd.f32 %v506, 1.0
    %v523 = vadd.f32 %v507, 1.0
    %v524 = vmul.f32 %v508, 0.5
    %v525 = vmul.f32 %v509, 0.5
    %v526 = vmul.f32 %v510, 0.5
    %v527 = vmul.f32 %v511, 0.5
    %v528 = vmul.f32 %v512, 0.5
    %v529 = vmul.f32 %v513, 0.5
    %v530 = vmul.f32 %v514, 0.5
    %v531 = vmul.f32 %v515, 0.5
    %v532 = vmul.f32 %v516, 0.5
    %v533 = vmul.f32 %v517, 0.5
    %v534 = vmul.f32 %v518, 0.5
    %v535 = vmul.f32 %v519, 0.5
    %v536 = vmul.f32 %v520, 0.5
    %v537 = vmul.f32 %v521, 0.5
    %v538 = vmul.f32 %v522, 0.5
    %v539 = vmul.f32 %v523, 0.5
    %v540 = vmul.f32 %v341, %v524
    %v541 = vmul.f32 %v343, %v525
    %v542 = vmul.f32 %v394, %v526
    %v543 = vmul.f32 %v396, %v527
    %v544 = vmul.f32 %v345, %v528
    %v545 = vmul.f32 %v347, %v529
    %v546 = vmul.f32 %v398, %v530
    %v547 = vmul.f32 %v400, %v531
    %v548 = vmul.f32 %v351, %v532
    %v549 = vmul.f32 %v353, %v533
    %v550 = vmul.f32 %v404, %v534
    %v551 = vmul.f32 %v406, %v535
    %v552 = vmul.f32 %v355, %v536
    %v553 = vmul.f32 %v357, %v537
    %v554 = vmul.f32 %v408, %v538
    %v555 = vmul.f32 %v410, %v539
    %v556 = vpack.c.bf16 %v544, %v540
    %v557 = vpack.c.bf16 %v545, %v541
    %v558 = vpack.c.bf16 %v546, %v542
    %v559 = vpack.c.bf16 %v547, %v543
    %v560 = vpack.c.bf16 %v552, %v548
    %v561 = vpack.c.bf16 %v553, %v549
    %v562 = vpack.c.bf16 %v554, %v550
    %v563 = vpack.c.bf16 %v555, %v551
    %v564 = vld [vmem:[#allocation8] sm:$0xf]
    %v565 = vld [vmem:[#allocation8 + $0x4] sm:$0xf]
    %v566 = vld [vmem:[#allocation8 + $0x8] sm:$0xf]
    %v567 = vld [vmem:[#allocation8 + $0xc] sm:$0xf]
    %v568 = vld [vmem:[#allocation8 + $0x10] sm:$0xf]
    %v569 = vld [vmem:[#allocation8 + $0x14] sm:$0xf]
    %v570 = vld [vmem:[#allocation8 + $0x18] sm:$0xf]
    %v571 = vld [vmem:[#allocation8 + $0x1c] sm:$0xf]
    %v572 = vld [vmem:[#allocation8 + $0x20] sm:$0xf]
    %v573 = vld [vmem:[#allocation8 + $0x24] sm:$0xf]
    %v574 = vld [vmem:[#allocation8 + $0x28] sm:$0xf]
    %v575 = vld [vmem:[#allocation8 + $0x2c] sm:$0xf]
    %v576 = vld [vmem:[#allocation8 + $0x30] sm:$0xf]
    %v577 = vld [vmem:[#allocation8 + $0x34] sm:$0xf]
    %v578 = vld [vmem:[#allocation8 + $0x38] sm:$0xf]
    %v579 = vld [vmem:[#allocation8 + $0x3c] sm:$0xf]
    %v580 = vld [vmem:[#allocation8 + $0x40] sm:$0xf]
    %v581 = vld [vmem:[#allocation8 + $0x44] sm:$0xf]
    %v582 = vld [vmem:[#allocation8 + $0x48] sm:$0xf]
    %v583 = vld [vmem:[#allocation8 + $0x4c] sm:$0xf]
    %v584 = vld [vmem:[#allocation8 + $0x50] sm:$0xf]
    %v585 = vld [vmem:[#allocation8 + $0x54] sm:$0xf]
    %v586 = vld [vmem:[#allocation8 + $0x58] sm:$0xf]
    %v587 = vld [vmem:[#allocation8 + $0x5c] sm:$0xf]
    %v588 = vld [vmem:[#allocation8 + $0x60] sm:$0xf]
    %v589 = vld [vmem:[#allocation8 + $0x64] sm:$0xf]
    %v590 = vld [vmem:[#allocation8 + $0x68] sm:$0xf]
    %v591 = vld [vmem:[#allocation8 + $0x6c] sm:$0xf]
    %v592 = vld [vmem:[#allocation8 + $0x70] sm:$0xf]
    %v593 = vld [vmem:[#allocation8 + $0x74] sm:$0xf]
    %v594 = vld [vmem:[#allocation8 + $0x78] sm:$0xf]
    %v595 = vld [vmem:[#allocation8 + $0x7c] sm:$0xf]
    %v596 = vld [vmem:[#allocation8 + $0x80] sm:$0xf]
    %v597 = vld [vmem:[#allocation8 + $0x84] sm:$0xf]
    %v598 = vld [vmem:[#allocation8 + $0x88] sm:$0xf]
    %v599 = vld [vmem:[#allocation8 + $0x8c] sm:$0xf]
    %v600 = vld [vmem:[#allocation8 + $0x90] sm:$0xf]
    %v601 = vld [vmem:[#allocation8 + $0x94] sm:$0xf]
    %v602 = vld [vmem:[#allocation8 + $0x98] sm:$0xf]
    %v603 = vld [vmem:[#allocation8 + $0x9c] sm:$0xf]
    %v604 = vld [vmem:[#allocation8 + $0xa0] sm:$0xf]
    %v605 = vld [vmem:[#allocation8 + $0xa4] sm:$0xf]
    %v606 = vld [vmem:[#allocation8 + $0xa8] sm:$0xf]
    %v607 = vld [vmem:[#allocation8 + $0xac] sm:$0xf]
    %v608 = vld [vmem:[#allocation8 + $0xb0] sm:$0xf]
    %v609 = vld [vmem:[#allocation8 + $0xb4] sm:$0xf]
    %v610 = vld [vmem:[#allocation8 + $0xb8] sm:$0xf]
    %v611 = vld [vmem:[#allocation8 + $0xbc] sm:$0xf]
    %v612 = vld [vmem:[#allocation8 + $0xc0] sm:$0xf]
    %v613 = vld [vmem:[#allocation8 + $0xc4] sm:$0xf]
    %v614 = vld [vmem:[#allocation8 + $0xc8] sm:$0xf]
    %v615 = vld [vmem:[#allocation8 + $0xcc] sm:$0xf]
    %v616 = vld [vmem:[#allocation8 + $0xd0] sm:$0xf]
    %v617 = vld [vmem:[#allocation8 + $0xd4] sm:$0xf]
    %v618 = vld [vmem:[#allocation8 + $0xd8] sm:$0xf]
    %v619 = vld [vmem:[#allocation8 + $0xdc] sm:$0xf]
    %v620 = vld [vmem:[#allocation8 + $0xe0] sm:$0xf]
    %v621 = vld [vmem:[#allocation8 + $0xe4] sm:$0xf]
    %v622 = vld [vmem:[#allocation8 + $0xe8] sm:$0xf]
    %v623 = vld [vmem:[#allocation8 + $0xec] sm:$0xf]
    %v624 = vld [vmem:[#allocation8 + $0xf0] sm:$0xf]
    %v625 = vld [vmem:[#allocation8 + $0xf4] sm:$0xf]
    %v626 = vld [vmem:[#allocation8 + $0xf8] sm:$0xf]
    %v627 = vld [vmem:[#allocation8 + $0xfc] sm:$0xf]
    %v628 = vld [vmem:[#allocation10] sm:$0x1]
    %v630 = vlaneseq
    %v631 = vshrl.u32 %v630, 7
    %v632 = vsub.s32 0, %v631
    %v633 = vrot.slane %v628, %v632
    %v699 = vunpack.c.l.b16 %v564
    %v700 = vunpack.c.l.b16 %v565
    %v701 = vunpack.c.l.b16 %v566
    %v702 = vunpack.c.l.b16 %v567
    %v703 = vunpack.c.l.b16 %v568
    %v704 = vunpack.c.l.b16 %v569
    %v705 = vunpack.c.l.b16 %v570
    %v706 = vunpack.c.l.b16 %v571
    %v707 = vunpack.c.l.b16 %v572
    %v708 = vunpack.c.l.b16 %v573
    %v709 = vunpack.c.l.b16 %v574
    %v710 = vunpack.c.l.b16 %v575
    %v711 = vunpack.c.l.b16 %v576
    %v712 = vunpack.c.l.b16 %v577
    %v713 = vunpack.c.l.b16 %v578
    %v714 = vunpack.c.l.b16 %v579
    %v715 = vunpack.c.l.b16 %v580
    %v716 = vunpack.c.l.b16 %v581
    %v717 = vunpack.c.l.b16 %v582
    %v718 = vunpack.c.l.b16 %v583
    %v719 = vunpack.c.l.b16 %v584
    %v720 = vunpack.c.l.b16 %v585
    %v721 = vunpack.c.l.b16 %v586
    %v722 = vunpack.c.l.b16 %v587
    %v723 = vunpack.c.l.b16 %v588
    %v724 = vunpack.c.l.b16 %v589
    %v725 = vunpack.c.l.b16 %v590
    %v726 = vunpack.c.l.b16 %v591
    %v727 = vunpack.c.l.b16 %v592
    %v728 = vunpack.c.l.b16 %v593
    %v729 = vunpack.c.l.b16 %v594
    %v730 = vunpack.c.l.b16 %v595
    %v731 = vunpack.c.l.b16 %v596
    %v732 = vunpack.c.l.b16 %v597
    %v733 = vunpack.c.l.b16 %v598
    %v734 = vunpack.c.l.b16 %v599
    %v735 = vunpack.c.l.b16 %v600
    %v736 = vunpack.c.l.b16 %v601
    %v737 = vunpack.c.l.b16 %v602
    %v738 = vunpack.c.l.b16 %v603
    %v739 = vunpack.c.l.b16 %v604
    %v740 = vunpack.c.l.b16 %v605
    %v741 = vunpack.c.l.b16 %v606
    %v742 = vunpack.c.l.b16 %v607
    %v743 = vunpack.c.l.b16 %v608
    %v744 = vunpack.c.l.b16 %v609
    %v745 = vunpack.c.l.b16 %v610
    %v746 = vunpack.c.l.b16 %v611
    %v747 = vunpack.c.l.b16 %v612
    %v748 = vunpack.c.l.b16 %v613
    %v749 = vunpack.c.l.b16 %v614
    %v750 = vunpack.c.l.b16 %v615
    %v751 = vunpack.c.l.b16 %v616
    %v752 = vunpack.c.l.b16 %v617
    %v753 = vunpack.c.l.b16 %v618
    %v754 = vunpack.c.l.b16 %v619
    %v755 = vunpack.c.l.b16 %v620
    %v756 = vunpack.c.l.b16 %v621
    %v757 = vunpack.c.l.b16 %v622
    %v758 = vunpack.c.l.b16 %v623
    %v759 = vunpack.c.l.b16 %v624
    %v760 = vunpack.c.l.b16 %v625
    %v761 = vunpack.c.l.b16 %v626
    %v762 = vunpack.c.l.b16 %v627
    %v763 = vpack.c.b16 %v700, %v699
    %v764 = vpack.c.b16 %v702, %v701
    %v765 = vpack.c.b16 %v704, %v703
    %v766 = vpack.c.b16 %v706, %v705
    %v767 = vpack.c.b16 %v708, %v707
    %v768 = vpack.c.b16 %v710, %v709
    %v769 = vpack.c.b16 %v712, %v711
    %v770 = vpack.c.b16 %v714, %v713
    %v771 = vpack.c.b16 %v716, %v715
    %v772 = vpack.c.b16 %v718, %v717
    %v773 = vpack.c.b16 %v720, %v719
    %v774 = vpack.c.b16 %v722, %v721
    %v775 = vpack.c.b16 %v724, %v723
    %v776 = vpack.c.b16 %v726, %v725
    %v777 = vpack.c.b16 %v728, %v727
    %v778 = vpack.c.b16 %v730, %v729
    %v779 = vpack.c.b16 %v732, %v731
    %v780 = vpack.c.b16 %v734, %v733
    %v781 = vpack.c.b16 %v736, %v735
    %v782 = vpack.c.b16 %v738, %v737
    %v783 = vpack.c.b16 %v740, %v739
    %v784 = vpack.c.b16 %v742, %v741
    %v785 = vpack.c.b16 %v744, %v743
    %v786 = vpack.c.b16 %v746, %v745
    %v787 = vpack.c.b16 %v748, %v747
    %v788 = vpack.c.b16 %v750, %v749
    %v789 = vpack.c.b16 %v752, %v751
    %v790 = vpack.c.b16 %v754, %v753
    %v791 = vpack.c.b16 %v756, %v755
    %v792 = vpack.c.b16 %v758, %v757
    %v793 = vpack.c.b16 %v760, %v759
    %v794 = vpack.c.b16 %v762, %v761
    %827 = vmatprep.subr.bf16.mxu0 0
    %828 = vmatpush1.bf16.msra.mxu0 %v763
    %829 = vmatprep.subr.bf16.mxu0 0
    %830 = vmatpush1.bf16.msra.mxu0 %v764
    %831 = vmatprep.subr.bf16.mxu0 0
    %832 = vmatpush1.bf16.msra.mxu0 %v765
    %833 = vmatprep.subr.bf16.mxu0 0
    %834 = vmatpush1.bf16.msra.mxu0 %v766
    %835 = vmatprep.subr.bf16.mxu0 0
    %836 = vmatpush1.bf16.msra.mxu0 %v767
    %837 = vmatprep.subr.bf16.mxu0 0
    %838 = vmatpush1.bf16.msra.mxu0 %v768
    %839 = vmatprep.subr.bf16.mxu0 0
    %840 = vmatpush1.bf16.msra.mxu0 %v769
    %841 = vmatprep.subr.bf16.mxu0 0
    %842 = vmatpush1.bf16.msra.mxu0 %v770
    %843 = vmatprep.subr.bf16.mxu0 0
    %844 = vmatpush1.bf16.msra.mxu0 %v771
    %845 = vmatprep.subr.bf16.mxu0 0
    %846 = vmatpush1.bf16.msra.mxu0 %v772
    %847 = vmatprep.subr.bf16.mxu0 0
    %848 = vmatpush1.bf16.msra.mxu0 %v773
    %849 = vmatprep.subr.bf16.mxu0 0
    %850 = vmatpush1.bf16.msra.mxu0 %v774
    %851 = vmatprep.subr.bf16.mxu0 0
    %852 = vmatpush1.bf16.msra.mxu0 %v775
    %853 = vmatprep.subr.bf16.mxu0 0
    %854 = vmatpush1.bf16.msra.mxu0 %v776
    %855 = vmatprep.subr.bf16.mxu0 0
    %856 = vmatpush1.bf16.msra.mxu0 %v777
    %857 = vmatprep.subr.bf16.mxu0 0
    %858 = vmatpush1.bf16.msra.mxu0 %v778
    %859 = vmatprep.mubr.bf16.mxu0 %v557
    %860 = vmatmul.mubr.bf16.gmra.mrb[0].mxu0 %v556
    %v861 = vpop.f32.mrb[0].mxu0
    %v862 = vadd.f32 %v633, %v861
    %v863 = vpop.f32.mrb[0].mxu0
    %v864 = vpop.f32.mrb[0].mxu0
    %v865 = vadd.f32 %v633, %v864
    %v866 = vpop.f32.mrb[0].mxu0
    %867 = vmatprep.mubr.bf16.mxu0 %v561
    %868 = vmatmul.mubr.bf16.gmra.mrb[0].mxu0 %v560
    %v869 = vpop.f32.mrb[0].mxu0
    %v870 = vadd.f32 %v633, %v869
    %v871 = vpop.f32.mrb[0].mxu0
    %v872 = vpop.f32.mrb[0].mxu0
    %v873 = vadd.f32 %v633, %v872
    %v874 = vpop.f32.mrb[0].mxu0
    %875 = vdwg.mxu0
    %876 = vmatprep.subr.bf16.mxu0 0
    %877 = vmatpush1.bf16.msra.mxu0 %v779
    %878 = vmatprep.subr.bf16.mxu0 0
    %879 = vmatpush1.bf16.msra.mxu0 %v780
    %880 = vmatprep.subr.bf16.mxu0 0
    %881 = vmatpush1.bf16.msra.mxu0 %v781
    %882 = vmatprep.subr.bf16.mxu0 0
    %883 = vmatpush1.bf16.msra.mxu0 %v782
    %884 = vmatprep.subr.bf16.mxu0 0
    %885 = vmatpush1.bf16.msra.mxu0 %v783
    %886 = vmatprep.subr.bf16.mxu0 0
    %887 = vmatpush1.bf16.msra.mxu0 %v784
    %888 = vmatprep.subr.bf16.mxu0 0
    %889 = vmatpush1.bf16.msra.mxu0 %v785
    %890 = vmatprep.subr.bf16.mxu0 0
    %891 = vmatpush1.bf16.msra.mxu0 %v786
    %892 = vmatprep.subr.bf16.mxu0 0
    %893 = vmatpush1.bf16.msra.mxu0 %v787
    %894 = vmatprep.subr.bf16.mxu0 0
    %895 = vmatpush1.bf16.msra.mxu0 %v788
    %896 = vmatprep.subr.bf16.mxu0 0
    %897 = vmatpush1.bf16.msra.mxu0 %v789
    %898 = vmatprep.subr.bf16.mxu0 0
    %899 = vmatpush1.bf16.msra.mxu0 %v790
    %900 = vmatprep.subr.bf16.mxu0 0
    %901 = vmatpush1.bf16.msra.mxu0 %v791
    %902 = vmatprep.subr.bf16.mxu0 0
    %903 = vmatpush1.bf16.msra.mxu0 %v792
    %904 = vmatprep.subr.bf16.mxu0 0
    %905 = vmatpush1.bf16.msra.mxu0 %v793
    %906 = vmatprep.subr.bf16.mxu0 0
    %907 = vmatpush1.bf16.msra.mxu0 %v794
    %908 = vmatprep.mubr.bf16.mxu0 %v559
    %909 = vmatmul.mubr.bf16.gmra.mrb[0].mxu0 %v558
    %v910 = vpop.f32.mrb[0].mxu0
    %v911 = vadd.f32 %v862, %v910
    %v912 = vpop.f32.mrb[0].mxu0
    %v913 = vpop.f32.mrb[0].mxu0
    %v914 = vadd.f32 %v865, %v913
    %v915 = vpop.f32.mrb[0].mxu0
    %916 = vmatprep.mubr.bf16.mxu0 %v563
    %917 = vmatmul.mubr.bf16.gmra.mrb[0].mxu0 %v562
    %v918 = vpop.f32.mrb[0].mxu0
    %v919 = vadd.f32 %v870, %v918
    %v920 = vpop.f32.mrb[0].mxu0
    %v921 = vpop.f32.mrb[0].mxu0
    %v922 = vadd.f32 %v873, %v921
    %v923 = vpop.f32.mrb[0].mxu0
    %924 = vdwg.mxu0
    %925 = vst [vmem:[#allocation11] sm:$0xff] %v911
    %926 = vst [vmem:[#allocation11 + $0x8] sm:$0xff] %v914
    %927 = vst [vmem:[#allocation11 + $0x10] sm:$0xff] %v919
    %928 = vst [vmem:[#allocation11 + $0x18] sm:$0xff] %v922
    // Predicated region
    $region42: #{tpu_custom_call.1} parent=1 // pred_check
      _
    $region43: #{tpu_custom_call.1} parent=1 // pred_check_branch
      %930 = sbr.rel (0) target = $region45
    $region44: #{tpu_custom_call.1} parent=1 // pred_region
      %s932 = ssub.s32 512, 512
      %933 = vsyncadd [#allocation4], %s932
      %s934 = sshll.u32 [#allocation11], 4
      %s935 = int_to_ptr.vmem [resolvable:$true] %s934
      %940 = dma.vmem_to_hbm [thread:$0]  %s935, 512, %s5, [#allocation4], 128, 128, 8
    $region45: #{tpu_custom_call.1} parent=1 // pred_fallthru
      _
    // Predicated region
    $region46: #{tpu_custom_call.1} parent=1 // pred_check
      _
    $region47: #{tpu_custom_call.1} parent=1 // pred_check_branch
      %942 = sbr.rel (0) target = $region49
    $region48: #{tpu_custom_call.1} parent=1 // pred_region
      %943 = dma.done [#allocation4], 512
    $region49: #{tpu_custom_call.1} parent=1 // pred_fallthru
      _
    %944 = vsyncpa [#allocation3], 1
    %945 = vsyncpa [#allocation6], 1
    %946 = vsyncpa [#allocation9], 1
    %947 = vsyncpa [#allocation4], 1

</llo_original>
